<compile_context>
chip_gen: v6e
topology: v6e:2x2x1
jax: 0.10.0
libtpu: 0.0.40
codegen_flags: <defaults>
</compile_context>

<pallas_src>
import functools

import jax
import jax.numpy as jnp
from jax import lax
from jax.experimental import pallas as pl
from jax.experimental.pallas import tpu as pltpu


def _vmem_capacity_bytes():
    try:
        return int(pltpu.get_tpu_info().vmem_capacity_bytes)
    except Exception:
        return 64 * 1024 * 1024  # v7x per-TC size: safe lower bound everywhere


def _full_row_kernel(w_ref, x_ref, o_ref):
    """Single-pass soft-argmax over full rows.

    w_ref: (8, N)  f32 constant; row 0 = base + step*i, row 1 = ones, rest 0.
    x_ref: (TB, N) input dtype.
    o_ref: (1, 1, TB) f32 -- lane-dense output row.
    """
    xv = x_ref[...]
    # Max in the native dtype (exact); the f32 cast fuses into the subtract
    # feeding exp, so no separate (TB, N) f32 copy of x is materialized.
    m = jnp.max(xv, axis=-1, keepdims=True)
    e = jnp.exp(xv.astype(jnp.float32) - m.astype(jnp.float32))   # (TB, N) f32

    # Both row reductions on the MXU (q @ k.T - style contraction); the batch
    # tile lands on the lanes of the result -> lane-dense output for free.
    s = lax.dot_general(
        w_ref[...], e,
        dimension_numbers=(((1,), (1,)), ((), ())),               # (8, TB)
        precision=lax.Precision.HIGHEST,
        preferred_element_type=jnp.float32)
    num = s[0:1, :]     # sum_i e_i * (base + step*i)   (1, TB)
    den = s[1:2, :]     # sum_i e_i                      (1, TB)

    inv = pl.reciprocal(den, approx=True)   # EUP slot
    inv = inv * (2.0 - den * inv)           # one Newton step -> full f32
    o_ref[...] = (num * inv)[None]          # (1, 1, TB), dense unmasked store


def _online_kernel(x_ref, o_ref, m_acc, d_acc, w_acc, *, base, step, n_total, tn):
    """Online-softmax path for rows too large to hold (plus intermediates) in VMEM."""
    n = pl.program_id(1)

    @pl.when(n == 0)
    def _():
        m_acc[...] = jnp.full_like(m_acc, -jnp.inf)
        d_acc[...] = jnp.zeros_like(d_acc)
        w_acc[...] = jnp.zeros_like(w_acc)

    xv = x_ref[...]                                    # (TB, TN)
    tb = xv.shape[0]
    lane = lax.broadcasted_iota(jnp.int32, (tb, tn), 1)
    col = n * tn + lane
    valid = col < n_total                              # masks ragged last N tile
    xf = jnp.where(valid, xv.astype(jnp.float32), -jnp.inf)

    m_tile = jnp.max(xf, axis=-1, keepdims=True)       # (TB, 1)
    m_new = jnp.maximum(m_acc[...], m_tile)
    alpha = jnp.exp(m_acc[...] - m_new)                # exp(-inf) = 0 on first tile
    e = jnp.where(valid, jnp.exp(xf - m_new), 0.0)
    idx = jnp.float32(base) + jnp.float32(step) * col.astype(jnp.float32)

    d_acc[...] = alpha * d_acc[...] + jnp.sum(e, axis=-1, keepdims=True)
    w_acc[...] = alpha * w_acc[...] + jnp.sum(e * idx, axis=-1, keepdims=True)
    m_acc[...] = m_new

    @pl.when(n == pl.num_programs(1) - 1)
    def _():
        den = d_acc[...]
        inv = pl.reciprocal(den, approx=True)
        inv = inv * (2.0 - den * inv)
        o_ref[...] = w_acc[...] * inv


def soft_argmax_1d(x, base_index=0, step_size=1, *, block_n=None):
    """Pallas TPU SoftArgmax1D.forward for a 2D input (B, N) -> (B,) float32.

    block_n: optional override of the N tile (forces the online-softmax path);
             mainly a test hook -- it is picked automatically for large N.
    """
    assert x.ndim == 2, "SoftArgmax1D expects a batch of 1D tensors (2D input)."
    B, N = x.shape
    itemsize = jnp.dtype(x.dtype).itemsize
    sub = max(8, 32 // itemsize)        # sublane granularity: 8/16/32 for 4/2/1-byte

    vmem_cap = _vmem_capacity_bytes()
    vmem_budget = vmem_cap // 2                                   # tiles + intermediates
    vmem_limit = max(32 * 2**20, min((vmem_cap * 3) // 4, 112 * 2**20))

    # Per-batch-row VMEM for the single-pass path: double-buffered input row,
    # the (TB, N) f32 exp tile, and slack for one fused temporary.
    row_bytes_full = N * (2 * itemsize + 8) + 256
    use_online = (block_n is not None and block_n < N) or (row_bytes_full * sub > vmem_budget)

    if not use_online:
        # ---------------- single-pass, full-row path ----------------
        tb = max(sub, (vmem_budget // row_bytes_full) // sub * sub)
        if B >= 2 * sub:
            # keep >= 2 grid steps so the "parallel" batch axis can feed both
            # TensorCores on v7x (no-op on v5e/v6e).
            tb = min(tb, pl.cdiv(pl.cdiv(B, 2), sub) * sub)
        if tb >= B:
            tb = B
        num_b = pl.cdiv(B, tb)

        idx = jnp.float32(base_index) + jnp.float32(step_size) * jnp.arange(
            N, dtype=jnp.float32)
        w = jnp.zeros((8, N), jnp.float32).at[0, :].set(idx).at[1, :].set(1.0)

        out = pl.pallas_call(
            _full_row_kernel,
            out_shape=jax.ShapeDtypeStruct((num_b, 1, tb), jnp.float32),
            grid=(num_b,),
            in_specs=[
                pl.BlockSpec((8, N), lambda i: (0, 0)),     # constant -> stays resident
                pl.BlockSpec((tb, N), lambda i: (i, 0)),    # ragged last block is fine
            ],
            out_specs=pl.BlockSpec((1, 1, tb), lambda i: (i, 0, 0)),
            compiler_params=pltpu.CompilerParams(
                dimension_semantics=("parallel",),          # v7x megacore sharding
                vmem_limit_bytes=vmem_limit,
            ),
            cost_estimate=pl.CostEstimate(
                flops=20 * B * N,
                transcendentals=B * N,
                bytes_accessed=B * N * itemsize + 8 * N * 4 + num_b * tb * 4,
            ),
        )(w, x)
        # Lane-dense (num_b, 1, tb) -> (B,); padded tail rows are discarded here.
        return out.reshape(num_b * tb)[:B]

    # ---------------- online-softmax (large-N) path ----------------
    if block_n is not None:
        tn = min(int(block_n), N)
        if tn < N:
            tn = max(128, (tn // 128) * 128)
    else:
        tn = (vmem_budget // (sub * (2 * itemsize + 8))) // 128 * 128
        tn = max(128, min(tn, pl.cdiv(N, 128) * 128))
    if tn >= N:
        tn = N
    num_n = pl.cdiv(N, tn)

    row_bytes = tn * (2 * itemsize + 8) + 256
    tb = max(sub, (vmem_budget // row_bytes) // sub * sub)
    if B >= 2 * sub:
        tb = min(tb, pl.cdiv(pl.cdiv(B, 2), sub) * sub)
    if tb >= B:
        tb = B
    num_b = pl.cdiv(B, tb)

    kernel = functools.partial(_online_kernel, base=float(base_index),
                               step=float(step_size), n_total=N, tn=tn)
    # TODO(synk): make this path's output lane-dense as well (needs a cheap
    # column->row relayout of the per-row accumulators at finalize).
    out = pl.pallas_call(
        kernel,
        out_shape=jax.ShapeDtypeStruct((B, 1), jnp.float32),
        grid=(num_b, num_n),
        in_specs=[pl.BlockSpec((tb, tn), lambda i, n: (i, n))],
        out_specs=pl.BlockSpec((tb, 1), lambda i, n: (i, 0)),   # resident across n
        scratch_shapes=[pltpu.VMEM((tb, 1), jnp.float32)] * 3,
        compiler_params=pltpu.CompilerParams(
            dimension_semantics=("parallel", "arbitrary"),
            vmem_limit_bytes=vmem_limit,
        ),
    )(x)
    return out[:, 0]


def _reference(x, base_index=0, step_size=1):
    xf = x.astype(jnp.float32)
    smax = jax.nn.softmax(xf, axis=1)
    idx = base_index + step_size * jnp.arange(x.shape[1], dtype=jnp.float32)
    # elementwise + reduce (exact f32) instead of matmul to avoid TPU bf16 demotion
    return jnp.sum(smax * idx[None, :], axis=1)


if __name__ == "__main__":
    key = jax.random.PRNGKey(0)
    cases = [
        # (B, N, base_index, step_size, dtype, block_n)
        (8, 128, 0, 1, jnp.float32, None),     # aligned, single block
        (6, 200, -3, 2, jnp.float32, None),    # ragged batch, affine indices
        (50, 96, 0, 1, jnp.float32, None),     # ragged batch -> 2 grid steps, no pad
        (8, 128, 0, 1, jnp.bfloat16, None),    # low-precision input, f32 output
        (6, 200, -3, 2, jnp.float32, 128),     # forced online-softmax path, ragged N
        (24, 384, 2, 3, jnp.bfloat16, 128),    # online path, 3 exact N tiles
    ]
    for case_idx, (B, N, base, step, dtype, bn) in enumerate(cases):
        key, kk = jax.random.split(key)
        x = jax.random.normal(kk, (B, N), dtype=jnp.float32).astype(dtype)

        out = jax.block_until_ready(
            soft_argmax_1d(x, base_index=base, step_size=step, block_n=bn))
        ref = _reference(x, base_index=base, step_size=step)

        assert out.shape == (B,), (case_idx, out.shape)
        assert out.dtype == jnp.float32, (case_idx, out.dtype)
        assert jnp.allclose(out, ref, atol=1e-3, rtol=1e-3), (case_idx, out, ref)

    print("KERNEL_OK")
</pallas_src>

<mosaic_0001>
module attributes {stable_mosaic.version = 11 : i64} {
  func.func @_full_row_kernel(%arg0: i32, %arg1: memref<8x128xf32, #tpu.memory_space<vmem>>, %arg2: memref<8x128xf32, #tpu.memory_space<vmem>>, %arg3: memref<1x1x8xf32, #tpu.memory_space<vmem>>) attributes {dimension_semantics = [#tpu.dimension_semantics<parallel>], iteration_bounds = array<i64: 1>, scalar_prefetch = 0 : i64, scratch_operands = 0 : i64, tpu.core_type = #tpu.core_type<tc>, window_params = [{pipeline_mode = #tpu.pipeline_mode<synchronous>, transform_indices = @transform_0, window_bounds = array<i64: 8, 128>}, {transform_indices = @transform_1, window_bounds = array<i64: 8, 128>}, {transform_indices = @transform_2, window_bounds = array<i64: 1, 1, 8>}]} {
    %c0 = arith.constant 0 : index
    %c0_0 = arith.constant 0 : index
    %0 = vector.load %arg2[%c0, %c0_0] : memref<8x128xf32, #tpu.memory_space<vmem>>, vector<8x128xf32>
    %cst = arith.constant dense<0xFF800000> : vector<8xf32>
    %1 = vector.multi_reduction <maximumf>, %0, %cst [1] : vector<8x128xf32> to vector<8xf32>
    %2 = vector.shape_cast %1 : vector<8xf32> to vector<8x1xf32>
    %3 = vector.broadcast %2 : vector<8x1xf32> to vector<8x128xf32>
    %4 = arith.subf %0, %3 : vector<8x128xf32>
    %5 = math.exp %4 : vector<8x128xf32>
    %c0_1 = arith.constant 0 : index
    %c0_2 = arith.constant 0 : index
    %6 = vector.load %arg1[%c0_1, %c0_2] : memref<8x128xf32, #tpu.memory_space<vmem>>, vector<8x128xf32>
    %cst_3 = arith.constant dense<0.000000e+00> : vector<8x8xf32>
    %7 = tpu.matmul %6, %5, %cst_3 {dimension_numbers = #tpu.dot_dimension_numbers<[1], [1], [0], [0], [0, 0, 1, 0], [], []>, precision = #tpu.contract_precision<fp32>} : vector<8x128xf32>, vector<8x128xf32>, vector<8x8xf32> -> vector<8x8xf32>
    %8 = vector.extract_strided_slice %7 {offsets = [0, 0], sizes = [1, 8], strides = [1, 1]} : vector<8x8xf32> to vector<1x8xf32>
    %9 = vector.extract_strided_slice %7 {offsets = [1, 0], sizes = [1, 8], strides = [1, 1]} : vector<8x8xf32> to vector<1x8xf32>
    %10 = tpu.reciprocal %9 {approx = true} : vector<1x8xf32> -> vector<1x8xf32>
    %11 = arith.mulf %9, %10 : vector<1x8xf32>
    %cst_4 = arith.constant 2.000000e+00 : f32
    %12 = vector.broadcast %cst_4 : f32 to vector<1x8xf32>
    %13 = arith.subf %12, %11 : vector<1x8xf32>
    %14 = arith.mulf %10, %13 : vector<1x8xf32>
    %15 = arith.mulf %8, %14 : vector<1x8xf32>
    %16 = vector.shape_cast %15 : vector<1x8xf32> to vector<1x1x8xf32>
    %c0_5 = arith.constant 0 : index
    %c0_6 = arith.constant 0 : index
    %c0_7 = arith.constant 0 : index
    %17 = vector.load %arg3[%c0_5, %c0_6, %c0_7] : memref<1x1x8xf32, #tpu.memory_space<vmem>>, vector<1x1x8xf32>
    tpu.vector_store %arg3[%c0_5, %c0_6, %c0_7], %16 {strides = array<i32>} : memref<1x1x8xf32, #tpu.memory_space<vmem>>, vector<1x1x8xf32>,
    return
  }
  func.func @transform_0(%arg0: i32) -> (i32, i32) {
    %c0_i32 = arith.constant 0 : i32
    %c0_i32_0 = arith.constant 0 : i32
    %c0_i32_1 = arith.constant 0 : i32
    return %c0_i32, %c0_i32_0 : i32, i32
  }
  func.func @transform_1(%arg0: i32) -> (i32, i32) {
    %c0_i32 = arith.constant 0 : i32
    %c0_i32_0 = arith.constant 0 : i32
    return %arg0, %c0_i32 : i32, i32
  }
  func.func @transform_2(%arg0: i32) -> (i32, i32, i32) {
    %c0_i32 = arith.constant 0 : i32
    %c0_i32_0 = arith.constant 0 : i32
    %c0_i32_1 = arith.constant 0 : i32
    return %arg0, %c0_i32, %c0_i32_0 : i32, i32, i32
  }
}

</mosaic_0001>

<llo_original>
// kernel: tpu_custom_call.1
$region0: #{tpu_custom_call.1}
  #allocation0 [shape = 'u32[]', space=smem, size = 0x4, offset = 0x4, fixed_abs, tag = 'smem constant byte address 0x4 - core index']
  #allocation1 [shape = 'u32[144,128]{1,0:T(1,128)}', space=vmem, size = 0x12000, scoped, tag = 'internal scratch']
  %s0 = inlined_call_operand.hbm [shape: f32[8,128], index: 0, kind: input, shape index: {}]
  %s1 = inlined_call_operand.hbm [shape: f32[8,128], index: 1, kind: input, shape index: {}]
  %s2 = inlined_call_operand.hbm [shape: f32[1,1,8], index: 2, kind: output, shape index: {}]
  %s3 = sld [smem:[#allocation0]]
  $region26: #{tpu_custom_call.1} parent=0
    _
  %s5 = ssub.s32 1, %s3
  %s6 = scalar_select 0, %s5, %s3
  $region1: #{tpu_custom_call.1} parent=0
    #allocation2 [shape = 'u8[4096]{0}', space=vmem, size = 0x1000, scoped, tag = 'input window, operand 0, single buffered']
    #allocation3 [shape = 's32[1]{0}', space=sflag, size = 0x4, scoped, tag = 'scoped memory for tpu_custom_call.1']
    #allocation4 [shape = 's32[1]{0}', space=sflag, size = 0x4, scoped, tag = 'scoped memory for tpu_custom_call.1']
    #allocation5 [shape = 'u8[4096]{0}', space=vmem, size = 0x1000, scoped, tag = 'input window, operand 1, single buffered']
    #allocation6 [shape = 's32[1]{0}', space=sflag, size = 0x4, scoped, tag = 'scoped memory for tpu_custom_call.1']
    #allocation7 [shape = 'u8[512]{0}', space=vmem, size = 0x400, scoped, tag = 'output window, operand 0, single buffered']
    %7 = vsyncpa [#allocation3], 0
    %8 = vsyncpa [#allocation6], 0
    %9 = vsyncpa [#allocation4], 0
    // Predicated region
    $region2: #{tpu_custom_call.1} parent=1 // pred_check
      _
    $region3: #{tpu_custom_call.1} parent=1 // pred_check_branch
      %11 = sbr.rel (0) target = $region5
    $region4: #{tpu_custom_call.1} parent=1 // pred_region
      %s13 = ssub.s32 128, 128
      %14 = vsyncadd [#allocation3], %s13
      %s16 = sshll.u32 [#allocation2], 4
      %s17 = int_to_ptr.vmem [resolvable:$true] %s16
      %19 = dma.hbm_to_vmem [thread:$0]  %s0, 128, %s17, [#allocation3]
    $region5: #{tpu_custom_call.1} parent=1 // pred_fallthru
      _
    // Predicated region
    $region6: #{tpu_custom_call.1} parent=1 // pred_check
      _
    $region7: #{tpu_custom_call.1} parent=1 // pred_check_branch
      %21 = sbr.rel (0) target = $region9
    $region8: #{tpu_custom_call.1} parent=1 // pred_region
      %s23 = ssub.s32 128, 128
      %24 = vsyncadd [#allocation6], %s23
      %s26 = sshll.u32 [#allocation5], 4
      %s27 = int_to_ptr.vmem [resolvable:$true] %s26
      %29 = dma.hbm_to_vmem [thread:$0]  %s1, 128, %s27, [#allocation6]
    $region9: #{tpu_custom_call.1} parent=1 // pred_fallthru
      _
    // Predicated region
    $region10: #{tpu_custom_call.1} parent=1 // pred_check
      _
    $region11: #{tpu_custom_call.1} parent=1 // pred_check_branch
      %31 = sbr.rel (0) target = $region13
    $region12: #{tpu_custom_call.1} parent=1 // pred_region
      %32 = dma.done [#allocation3], 128
    $region13: #{tpu_custom_call.1} parent=1 // pred_fallthru
      _
    // Predicated region
    $region14: #{tpu_custom_call.1} parent=1 // pred_check
      _
    $region15: #{tpu_custom_call.1} parent=1 // pred_check_branch
      %34 = sbr.rel (0) target = $region17
    $region16: #{tpu_custom_call.1} parent=1 // pred_region
      %35 = dma.done [#allocation6], 128
    $region17: #{tpu_custom_call.1} parent=1 // pred_fallthru
      _
    %v36 = vld [vmem:[#allocation5] sm:$0xff]
    %37 = vmax.xlane.f32.xlu0 %v36
    %v38 = vpop.xlane.xlu0 %37
    %v39 = vsub.f32 %v36, %v38
    %v40 = vmul.f32 %v39, 1.442695
    %v41 = vpow.pop %v40
    %v42 = vld [vmem:[#allocation2] sm:$0xff]
    %43 = vmatprep.subr.mxu0 0.0
    %44 = vmatpush1.xpose.msra.mxu0 0.0
    %45 = vmatprep.subr.mxu0 0.0
    %46 = vmatpush1.xpose.msra.mxu0 0.0
    %47 = vmatprep.subr.mxu0 0.0
    %48 = vmatpush1.xpose.msra.mxu0 0.0
    %49 = vmatprep.subr.mxu0 0.0
    %50 = vmatpush1.xpose.msra.mxu0 0.0
    %51 = vmatprep.subr.mxu0 0.0
    %52 = vmatpush1.xpose.msra.mxu0 0.0
    %53 = vmatprep.subr.mxu0 0.0
    %54 = vmatpush1.xpose.msra.mxu0 0.0
    %55 = vmatprep.subr.mxu0 0.0
    %56 = vmatpush1.xpose.msra.mxu0 0.0
    %57 = vmatprep.subr.mxu0 0.0
    %58 = vmatpush1.xpose.msra.mxu0 0.0
    %59 = vmatprep.subr.mxu0 0.0
    %60 = vmatpush1.xpose.msra.mxu0 0.0
    %61 = vmatprep.subr.mxu0 0.0
    %62 = vmatpush1.xpose.msra.mxu0 0.0
    %63 = vmatprep.subr.mxu0 0.0
    %64 = vmatpush1.xpose.msra.mxu0 0.0
    %65 = vmatprep.subr.mxu0 0.0
    %66 = vmatpush1.xpose.msra.mxu0 0.0
    %67 = vmatprep.subr.mxu0 0.0
    %68 = vmatpush1.xpose.msra.mxu0 0.0
    %69 = vmatprep.subr.mxu0 0.0
    %70 = vmatpush1.xpose.msra.mxu0 0.0
    %71 = vmatprep.subr.mxu0 0.0
    %72 = vmatpush1.xpose.msra.mxu0 0.0
    %73 = vmatprep.subr.mxu0 0.0
    %v74 = vand.u32 %v41, 4294901760
    %75 = vmatpush1.xpose.msra.mxu0 %v74
    %76 = vmatprep.subr.mxu0 0.0
    %77 = vmatpush2.xpose.msra.mxu0 0.0
    %78 = vmatprep.subr.mxu0 0.0
    %79 = vmatpush2.xpose.msra.mxu0 0.0
    %80 = vmatprep.subr.mxu0 0.0
    %81 = vmatpush2.xpose.msra.mxu0 0.0
    %82 = vmatprep.subr.mxu0 0.0
    %83 = vmatpush2.xpose.msra.mxu0 0.0
    %84 = vmatprep.subr.mxu0 0.0
    %85 = vmatpush2.xpose.msra.mxu0 0.0
    %86 = vmatprep.subr.mxu0 0.0
    %87 = vmatpush2.xpose.msra.mxu0 0.0
    %88 = vmatprep.subr.mxu0 0.0
    %89 = vmatpush2.xpose.msra.mxu0 0.0
    %90 = vmatprep.subr.mxu0 0.0
    %91 = vmatpush2.xpose.msra.mxu0 0.0
    %92 = vmatprep.subr.mxu0 0.0
    %93 = vmatpush2.xpose.msra.mxu0 0.0
    %94 = vmatprep.subr.mxu0 0.0
    %95 = vmatpush2.xpose.msra.mxu0 0.0
    %96 = vmatprep.subr.mxu0 0.0
    %97 = vmatpush2.xpose.msra.mxu0 0.0
    %98 = vmatprep.subr.mxu0 0.0
    %99 = vmatpush2.xpose.msra.mxu0 0.0
    %100 = vmatprep.subr.mxu0 0.0
    %101 = vmatpush2.xpose.msra.mxu0 0.0
    %102 = vmatprep.subr.mxu0 0.0
    %103 = vmatpush2.xpose.msra.mxu0 0.0
    %104 = vmatprep.subr.mxu0 0.0
    %105 = vmatpush2.xpose.msra.mxu0 0.0
    %106 = vmatprep.subr.mxu0 0.0
    %107 = vmatpush2.xpose.msra.mxu0 0.0
    %108 = vmatprep.mubr.f32.mxu0 0.0
    %v109 = vand.u32 %v42, 4294901760
    %v110 = vsub.f32 %v42, %v109
    %v111 = vand.u32 %v110, 4294901760
    %v112 = vsub.f32 %v110, %v111
    %v113 = vand.u32 %v112, 4294901760
    %114 = vmatmul.mubr.f32.gmra.mxu0 %v113
    %v115 = vpop.f32.mrf.mxu0
    %v116 = vadd.f32 0.0, %v115
    %v117 = vpop.f32.mrf.mxu0
    %118 = vdwg.mxu0
    %119 = vmatprep.subr.mxu0 0.0
    %120 = vmatpush1.xpose.msra.mxu0 0.0
    %121 = vmatprep.subr.mxu0 0.0
    %122 = vmatpush1.xpose.msra.mxu0 0.0
    %123 = vmatprep.subr.mxu0 0.0
    %124 = vmatpush1.xpose.msra.mxu0 0.0
    %125 = vmatprep.subr.mxu0 0.0
    %126 = vmatpush1.xpose.msra.mxu0 0.0
    %127 = vmatprep.subr.mxu0 0.0
    %128 = vmatpush1.xpose.msra.mxu0 0.0
    %129 = vmatprep.subr.mxu0 0.0
    %130 = vmatpush1.xpose.msra.mxu0 0.0
    %131 = vmatprep.subr.mxu0 0.0
    %132 = vmatpush1.xpose.msra.mxu0 0.0
    %133 = vmatprep.subr.mxu0 0.0
    %134 = vmatpush1.xpose.msra.mxu0 0.0
    %135 = vmatprep.subr.mxu0 0.0
    %136 = vmatpush1.xpose.msra.mxu0 0.0
    %137 = vmatprep.subr.mxu0 0.0
    %138 = vmatpush1.xpose.msra.mxu0 0.0
    %139 = vmatprep.subr.mxu0 0.0
    %140 = vmatpush1.xpose.msra.mxu0 0.0
    %141 = vmatprep.subr.mxu0 0.0
    %142 = vmatpush1.xpose.msra.mxu0 0.0
    %143 = vmatprep.subr.mxu0 0.0
    %144 = vmatpush1.xpose.msra.mxu0 0.0
    %145 = vmatprep.subr.mxu0 0.0
    %146 = vmatpush1.xpose.msra.mxu0 0.0
    %147 = vmatprep.subr.mxu0 0.0
    %148 = vmatpush1.xpose.msra.mxu0 0.0
    %149 = vmatprep.subr.mxu0 0.0
    %v150 = vand.u32 %v41, 4294901760
    %v151 = vsub.f32 %v41, %v150
    %v152 = vand.u32 %v151, 4294901760
    %v153 = vsub.f32 %v151, %v152
    %v154 = vand.u32 %v153, 4294901760
    %155 = vmatpush1.xpose.msra.mxu0 %v154
    %156 = vmatprep.subr.mxu0 0.0
    %157 = vmatpush2.xpose.msra.mxu0 0.0
    %158 = vmatprep.subr.mxu0 0.0
    %159 = vmatpush2.xpose.msra.mxu0 0.0
    %160 = vmatprep.subr.mxu0 0.0
    %161 = vmatpush2.xpose.msra.mxu0 0.0
    %162 = vmatprep.subr.mxu0 0.0
    %163 = vmatpush2.xpose.msra.mxu0 0.0
    %164 = vmatprep.subr.mxu0 0.0
    %165 = vmatpush2.xpose.msra.mxu0 0.0
    %166 = vmatprep.subr.mxu0 0.0
    %167 = vmatpush2.xpose.msra.mxu0 0.0
    %168 = vmatprep.subr.mxu0 0.0
    %169 = vmatpush2.xpose.msra.mxu0 0.0
    %170 = vmatprep.subr.mxu0 0.0
    %171 = vmatpush2.xpose.msra.mxu0 0.0
    %172 = vmatprep.subr.mxu0 0.0
    %173 = vmatpush2.xpose.msra.mxu0 0.0
    %174 = vmatprep.subr.mxu0 0.0
    %175 = vmatpush2.xpose.msra.mxu0 0.0
    %176 = vmatprep.subr.mxu0 0.0
    %177 = vmatpush2.xpose.msra.mxu0 0.0
    %178 = vmatprep.subr.mxu0 0.0
    %179 = vmatpush2.xpose.msra.mxu0 0.0
    %180 = vmatprep.subr.mxu0 0.0
    %181 = vmatpush2.xpose.msra.mxu0 0.0
    %182 = vmatprep.subr.mxu0 0.0
    %183 = vmatpush2.xpose.msra.mxu0 0.0
    %184 = vmatprep.subr.mxu0 0.0
    %185 = vmatpush2.xpose.msra.mxu0 0.0
    %186 = vmatprep.subr.mxu0 0.0
    %187 = vmatpush2.xpose.msra.mxu0 0.0
    %188 = vmatprep.mubr.f32.mxu0 0.0
    %v189 = vand.u32 %v42, 4294901760
    %190 = vmatmul.mubr.f32.gmra.mxu0 %v189
    %v191 = vpop.f32.mrf.mxu0
    %v192 = vadd.f32 %v116, %v191
    %v193 = vpop.f32.mrf.mxu0
    %194 = vdwg.mxu0
    %195 = vmatprep.subr.mxu0 0.0
    %196 = vmatpush1.xpose.msra.mxu0 0.0
    %197 = vmatprep.subr.mxu0 0.0
    %198 = vmatpush1.xpose.msra.mxu0 0.0
    %199 = vmatprep.subr.mxu0 0.0
    %200 = vmatpush1.xpose.msra.mxu0 0.0
    %201 = vmatprep.subr.mxu0 0.0
    %202 = vmatpush1.xpose.msra.mxu0 0.0
    %203 = vmatprep.subr.mxu0 0.0
    %204 = vmatpush1.xpose.msra.mxu0 0.0
    %205 = vmatprep.subr.mxu0 0.0
    %206 = vmatpush1.xpose.msra.mxu0 0.0
    %207 = vmatprep.subr.mxu0 0.0
    %208 = vmatpush1.xpose.msra.mxu0 0.0
    %209 = vmatprep.subr.mxu0 0.0
    %210 = vmatpush1.xpose.msra.mxu0 0.0
    %211 = vmatprep.subr.mxu0 0.0
    %212 = vmatpush1.xpose.msra.mxu0 0.0
    %213 = vmatprep.subr.mxu0 0.0
    %214 = vmatpush1.xpose.msra.mxu0 0.0
    %215 = vmatprep.subr.mxu0 0.0
    %216 = vmatpush1.xpose.msra.mxu0 0.0
    %217 = vmatprep.subr.mxu0 0.0
    %218 = vmatpush1.xpose.msra.mxu0 0.0
    %219 = vmatprep.subr.mxu0 0.0
    %220 = vmatpush1.xpose.msra.mxu0 0.0
    %221 = vmatprep.subr.mxu0 0.0
    %222 = vmatpush1.xpose.msra.mxu0 0.0
    %223 = vmatprep.subr.mxu0 0.0
    %224 = vmatpush1.xpose.msra.mxu0 0.0
    %225 = vmatprep.subr.mxu0 0.0
    %v226 = vand.u32 %v41, 4294901760
    %v227 = vsub.f32 %v41, %v226
    %228 = vmatpush1.xpose.msra.mxu0 %v227
    %229 = vmatprep.subr.mxu0 0.0
    %230 = vmatpush2.xpose.msra.mxu0 0.0
    %231 = vmatprep.subr.mxu0 0.0
    %232 = vmatpush2.xpose.msra.mxu0 0.0
    %233 = vmatprep.subr.mxu0 0.0
    %234 = vmatpush2.xpose.msra.mxu0 0.0
    %235 = vmatprep.subr.mxu0 0.0
    %236 = vmatpush2.xpose.msra.mxu0 0.0
    %237 = vmatprep.subr.mxu0 0.0
    %238 = vmatpush2.xpose.msra.mxu0 0.0
    %239 = vmatprep.subr.mxu0 0.0
    %240 = vmatpush2.xpose.msra.mxu0 0.0
    %241 = vmatprep.subr.mxu0 0.0
    %242 = vmatpush2.xpose.msra.mxu0 0.0
    %243 = vmatprep.subr.mxu0 0.0
    %244 = vmatpush2.xpose.msra.mxu0 0.0
    %245 = vmatprep.subr.mxu0 0.0
    %246 = vmatpush2.xpose.msra.mxu0 0.0
    %247 = vmatprep.subr.mxu0 0.0
    %248 = vmatpush2.xpose.msra.mxu0 0.0
    %249 = vmatprep.subr.mxu0 0.0
    %250 = vmatpush2.xpose.msra.mxu0 0.0
    %251 = vmatprep.subr.mxu0 0.0
    %252 = vmatpush2.xpose.msra.mxu0 0.0
    %253 = vmatprep.subr.mxu0 0.0
    %254 = vmatpush2.xpose.msra.mxu0 0.0
    %255 = vmatprep.subr.mxu0 0.0
    %256 = vmatpush2.xpose.msra.mxu0 0.0
    %257 = vmatprep.subr.mxu0 0.0
    %258 = vmatpush2.xpose.msra.mxu0 0.0
    %259 = vmatprep.subr.mxu0 0.0
    %260 = vmatpush2.xpose.msra.mxu0 0.0
    %261 = vmatprep.mubr.f32.mxu0 0.0
    %v262 = vand.u32 %v42, 4294901760
    %v263 = vsub.f32 %v42, %v262
    %264 = vmatmul.mubr.f32.gmra.mxu0 %v263
    %v265 = vpop.f32.mrf.mxu0
    %v266 = vadd.f32 %v192, %v265
    %v267 = vpop.f32.mrf.mxu0
    %268 = vdwg.mxu0
    %269 = vmatprep.subr.mxu0 0.0
    %270 = vmatpush1.xpose.msra.mxu0 0.0
    %271 = vmatprep.subr.mxu0 0.0
    %272 = vmatpush1.xpose.msra.mxu0 0.0
    %273 = vmatprep.subr.mxu0 0.0
    %274 = vmatpush1.xpose.msra.mxu0 0.0
    %275 = vmatprep.subr.mxu0 0.0
    %276 = vmatpush1.xpose.msra.mxu0 0.0
    %277 = vmatprep.subr.mxu0 0.0
    %278 = vmatpush1.xpose.msra.mxu0 0.0
    %279 = vmatprep.subr.mxu0 0.0
    %280 = vmatpush1.xpose.msra.mxu0 0.0
    %281 = vmatprep.subr.mxu0 0.0
    %282 = vmatpush1.xpose.msra.mxu0 0.0
    %283 = vmatprep.subr.mxu0 0.0
    %284 = vmatpush1.xpose.msra.mxu0 0.0
    %285 = vmatprep.subr.mxu0 0.0
    %286 = vmatpush1.xpose.msra.mxu0 0.0
    %287 = vmatprep.subr.mxu0 0.0
    %288 = vmatpush1.xpose.msra.mxu0 0.0
    %289 = vmatprep.subr.mxu0 0.0
    %290 = vmatpush1.xpose.msra.mxu0 0.0
    %291 = vmatprep.subr.mxu0 0.0
    %292 = vmatpush1.xpose.msra.mxu0 0.0
    %293 = vmatprep.subr.mxu0 0.0
    %294 = vmatpush1.xpose.msra.mxu0 0.0
    %295 = vmatprep.subr.mxu0 0.0
    %296 = vmatpush1.xpose.msra.mxu0 0.0
    %297 = vmatprep.subr.mxu0 0.0
    %298 = vmatpush1.xpose.msra.mxu0 0.0
    %299 = vmatprep.subr.mxu0 0.0
    %v300 = vand.u32 %v41, 4294901760
    %301 = vmatpush1.xpose.msra.mxu0 %v300
    %302 = vmatprep.subr.mxu0 0.0
    %303 = vmatpush2.xpose.msra.mxu0 0.0
    %304 = vmatprep.subr.mxu0 0.0
    %305 = vmatpush2.xpose.msra.mxu0 0.0
    %306 = vmatprep.subr.mxu0 0.0
    %307 = vmatpush2.xpose.msra.mxu0 0.0
    %308 = vmatprep.subr.mxu0 0.0
    %309 = vmatpush2.xpose.msra.mxu0 0.0
    %310 = vmatprep.subr.mxu0 0.0
    %311 = vmatpush2.xpose.msra.mxu0 0.0
    %312 = vmatprep.subr.mxu0 0.0
    %313 = vmatpush2.xpose.msra.mxu0 0.0
    %314 = vmatprep.subr.mxu0 0.0
    %315 = vmatpush2.xpose.msra.mxu0 0.0
    %316 = vmatprep.subr.mxu0 0.0
    %317 = vmatpush2.xpose.msra.mxu0 0.0
    %318 = vmatprep.subr.mxu0 0.0
    %319 = vmatpush2.xpose.msra.mxu0 0.0
    %320 = vmatprep.subr.mxu0 0.0
    %321 = vmatpush2.xpose.msra.mxu0 0.0
    %322 = vmatprep.subr.mxu0 0.0
    %323 = vmatpush2.xpose.msra.mxu0 0.0
    %324 = vmatprep.subr.mxu0 0.0
    %325 = vmatpush2.xpose.msra.mxu0 0.0
    %326 = vmatprep.subr.mxu0 0.0
    %327 = vmatpush2.xpose.msra.mxu0 0.0
    %328 = vmatprep.subr.mxu0 0.0
    %329 = vmatpush2.xpose.msra.mxu0 0.0
    %330 = vmatprep.subr.mxu0 0.0
    %331 = vmatpush2.xpose.msra.mxu0 0.0
    %332 = vmatprep.subr.mxu0 0.0
    %333 = vmatpush2.xpose.msra.mxu0 0.0
    %334 = vmatprep.mubr.f32.mxu0 0.0
    %v335 = vand.u32 %v42, 4294901760
    %v336 = vsub.f32 %v42, %v335
    %v337 = vand.u32 %v336, 4294901760
    %338 = vmatmul.mubr.f32.gmra.mxu0 %v337
    %v339 = vpop.f32.mrf.mxu0
    %v340 = vadd.f32 %v266, %v339
    %v341 = vpop.f32.mrf.mxu0
    %342 = vdwg.mxu0
    %343 = vmatprep.subr.mxu0 0.0
    %344 = vmatpush1.xpose.msra.mxu0 0.0
    %345 = vmatprep.subr.mxu0 0.0
    %346 = vmatpush1.xpose.msra.mxu0 0.0
    %347 = vmatprep.subr.mxu0 0.0
    %348 = vmatpush1.xpose.msra.mxu0 0.0
    %349 = vmatprep.subr.mxu0 0.0
    %350 = vmatpush1.xpose.msra.mxu0 0.0
    %351 = vmatprep.subr.mxu0 0.0
    %352 = vmatpush1.xpose.msra.mxu0 0.0
    %353 = vmatprep.subr.mxu0 0.0
    %354 = vmatpush1.xpose.msra.mxu0 0.0
    %355 = vmatprep.subr.mxu0 0.0
    %356 = vmatpush1.xpose.msra.mxu0 0.0
    %357 = vmatprep.subr.mxu0 0.0
    %358 = vmatpush1.xpose.msra.mxu0 0.0
    %359 = vmatprep.subr.mxu0 0.0
    %360 = vmatpush1.xpose.msra.mxu0 0.0
    %361 = vmatprep.subr.mxu0 0.0
    %362 = vmatpush1.xpose.msra.mxu0 0.0
    %363 = vmatprep.subr.mxu0 0.0
    %364 = vmatpush1.xpose.msra.mxu0 0.0
    %365 = vmatprep.subr.mxu0 0.0
    %366 = vmatpush1.xpose.msra.mxu0 0.0
    %367 = vmatprep.subr.mxu0 0.0
    %368 = vmatpush1.xpose.msra.mxu0 0.0
    %369 = vmatprep.subr.mxu0 0.0
    %370 = vmatpush1.xpose.msra.mxu0 0.0
    %371 = vmatprep.subr.mxu0 0.0
    %372 = vmatpush1.xpose.msra.mxu0 0.0
    %373 = vmatprep.subr.mxu0 0.0
    %v374 = vand.u32 %v41, 4294901760
    %v375 = vsub.f32 %v41, %v374
    %v376 = vand.u32 %v375, 4294901760
    %377 = vmatpush1.xpose.msra.mxu0 %v376
    %378 = vmatprep.subr.mxu0 0.0
    %379 = vmatpush2.xpose.msra.mxu0 0.0
    %380 = vmatprep.subr.mxu0 0.0
    %381 = vmatpush2.xpose.msra.mxu0 0.0
    %382 = vmatprep.subr.mxu0 0.0
    %383 = vmatpush2.xpose.msra.mxu0 0.0
    %384 = vmatprep.subr.mxu0 0.0
    %385 = vmatpush2.xpose.msra.mxu0 0.0
    %386 = vmatprep.subr.mxu0 0.0
    %387 = vmatpush2.xpose.msra.mxu0 0.0
    %388 = vmatprep.subr.mxu0 0.0
    %389 = vmatpush2.xpose.msra.mxu0 0.0
    %390 = vmatprep.subr.mxu0 0.0
    %391 = vmatpush2.xpose.msra.mxu0 0.0
    %392 = vmatprep.subr.mxu0 0.0
    %393 = vmatpush2.xpose.msra.mxu0 0.0
    %394 = vmatprep.subr.mxu0 0.0
    %395 = vmatpush2.xpose.msra.mxu0 0.0
    %396 = vmatprep.subr.mxu0 0.0
    %397 = vmatpush2.xpose.msra.mxu0 0.0
    %398 = vmatprep.subr.mxu0 0.0
    %399 = vmatpush2.xpose.msra.mxu0 0.0
    %400 = vmatprep.subr.mxu0 0.0
    %401 = vmatpush2.xpose.msra.mxu0 0.0
    %402 = vmatprep.subr.mxu0 0.0
    %403 = vmatpush2.xpose.msra.mxu0 0.0
    %404 = vmatprep.subr.mxu0 0.0
    %405 = vmatpush2.xpose.msra.mxu0 0.0
    %406 = vmatprep.subr.mxu0 0.0
    %407 = vmatpush2.xpose.msra.mxu0 0.0
    %408 = vmatprep.subr.mxu0 0.0
    %409 = vmatpush2.xpose.msra.mxu0 0.0
    %410 = vmatprep.mubr.f32.mxu0 0.0
    %v411 = vand.u32 %v42, 4294901760
    %412 = vmatmul.mubr.f32.gmra.mxu0 %v411
    %v413 = vpop.f32.mrf.mxu0
    %v414 = vadd.f32 %v340, %v413
    %v415 = vpop.f32.mrf.mxu0
    %416 = vdwg.mxu0
    %417 = vmatprep.subr.mxu0 0.0
    %418 = vmatpush1.xpose.msra.mxu0 0.0
    %419 = vmatprep.subr.mxu0 0.0
    %420 = vmatpush1.xpose.msra.mxu0 0.0
    %421 = vmatprep.subr.mxu0 0.0
    %422 = vmatpush1.xpose.msra.mxu0 0.0
    %423 = vmatprep.subr.mxu0 0.0
    %424 = vmatpush1.xpose.msra.mxu0 0.0
    %425 = vmatprep.subr.mxu0 0.0
    %426 = vmatpush1.xpose.msra.mxu0 0.0
    %427 = vmatprep.subr.mxu0 0.0
    %428 = vmatpush1.xpose.msra.mxu0 0.0
    %429 = vmatprep.subr.mxu0 0.0
    %430 = vmatpush1.xpose.msra.mxu0 0.0
    %431 = vmatprep.subr.mxu0 0.0
    %432 = vmatpush1.xpose.msra.mxu0 0.0
    %433 = vmatprep.subr.mxu0 0.0
    %434 = vmatpush1.xpose.msra.mxu0 0.0
    %435 = vmatprep.subr.mxu0 0.0
    %436 = vmatpush1.xpose.msra.mxu0 0.0
    %437 = vmatprep.subr.mxu0 0.0
    %438 = vmatpush1.xpose.msra.mxu0 0.0
    %439 = vmatprep.subr.mxu0 0.0
    %440 = vmatpush1.xpose.msra.mxu0 0.0
    %441 = vmatprep.subr.mxu0 0.0
    %442 = vmatpush1.xpose.msra.mxu0 0.0
    %443 = vmatprep.subr.mxu0 0.0
    %444 = vmatpush1.xpose.msra.mxu0 0.0
    %445 = vmatprep.subr.mxu0 0.0
    %446 = vmatpush1.xpose.msra.mxu0 0.0
    %447 = vmatprep.subr.mxu0 0.0
    %v448 = vand.u32 %v41, 4294901760
    %449 = vmatpush1.xpose.msra.mxu0 %v448
    %450 = vmatprep.subr.mxu0 0.0
    %451 = vmatpush2.xpose.msra.mxu0 0.0
    %452 = vmatprep.subr.mxu0 0.0
    %453 = vmatpush2.xpose.msra.mxu0 0.0
    %454 = vmatprep.subr.mxu0 0.0
    %455 = vmatpush2.xpose.msra.mxu0 0.0
    %456 = vmatprep.subr.mxu0 0.0
    %457 = vmatpush2.xpose.msra.mxu0 0.0
    %458 = vmatprep.subr.mxu0 0.0
    %459 = vmatpush2.xpose.msra.mxu0 0.0
    %460 = vmatprep.subr.mxu0 0.0
    %461 = vmatpush2.xpose.msra.mxu0 0.0
    %462 = vmatprep.subr.mxu0 0.0
    %463 = vmatpush2.xpose.msra.mxu0 0.0
    %464 = vmatprep.subr.mxu0 0.0
    %465 = vmatpush2.xpose.msra.mxu0 0.0
    %466 = vmatprep.subr.mxu0 0.0
    %467 = vmatpush2.xpose.msra.mxu0 0.0
    %468 = vmatprep.subr.mxu0 0.0
    %469 = vmatpush2.xpose.msra.mxu0 0.0
    %470 = vmatprep.subr.mxu0 0.0
    %471 = vmatpush2.xpose.msra.mxu0 0.0
    %472 = vmatprep.subr.mxu0 0.0
    %473 = vmatpush2.xpose.msra.mxu0 0.0
    %474 = vmatprep.subr.mxu0 0.0
    %475 = vmatpush2.xpose.msra.mxu0 0.0
    %476 = vmatprep.subr.mxu0 0.0
    %477 = vmatpush2.xpose.msra.mxu0 0.0
    %478 = vmatprep.subr.mxu0 0.0
    %479 = vmatpush2.xpose.msra.mxu0 0.0
    %480 = vmatprep.subr.mxu0 0.0
    %481 = vmatpush2.xpose.msra.mxu0 0.0
    %482 = vmatprep.mubr.f32.mxu0 0.0
    %v483 = vand.u32 %v42, 4294901760
    %484 = vmatmul.mubr.f32.gmra.mxu0 %v483
    %v485 = vpop.f32.mrf.mxu0
    %v486 = vadd.f32 %v414, %v485
    %v487 = vpop.f32.mrf.mxu0
    %488 = vdwg.mxu0
    %v489 = vrcp.pop %v486
    %v490 = vmul.f32 %v486, %v489
    %v491 = vsub.f32 2.0, %v490
    %v492 = vmul.f32 %v489, %v491
    %v494 = vrot.slane %v492, 1
    %v496 = vmul.f32 %v486, %v494
    %vm497 = vcmask 57344
    %498 = vst.msk [vmem:[#allocation7] sm:$0x1] %vm497, %v496
    // Predicated region
    $region18: #{tpu_custom_call.1} parent=1 // pred_check
      _
    $region19: #{tpu_custom_call.1} parent=1 // pred_check_branch
      %500 = sbr.rel (0) target = $region21
    $region20: #{tpu_custom_call.1} parent=1 // pred_region
      %s502 = ssub.s32 16, 16
      %503 = vsyncadd [#allocation4], %s502
      %s505 = sshll.u32 [#allocation7], 4
      %s506 = int_to_ptr.vmem [resolvable:$true] %s505
      %508 = dma.vmem_to_hbm [thread:$0]  %s506, 16, %s2, [#allocation4]
    $region21: #{tpu_custom_call.1} parent=1 // pred_fallthru
      _
    // Predicated region
    $region22: #{tpu_custom_call.1} parent=1 // pred_check
      _
    $region23: #{tpu_custom_call.1} parent=1 // pred_check_branch
      %510 = sbr.rel (0) target = $region25
    $region24: #{tpu_custom_call.1} parent=1 // pred_region
      %511 = dma.done [#allocation4], 16
    $region25: #{tpu_custom_call.1} parent=1 // pred_fallthru
      _
    %512 = vsyncpa [#allocation3], 1
    %513 = vsyncpa [#allocation6], 1
    %514 = vsyncpa [#allocation4], 1

</llo_original>
